<compile_context>
chip_gen: v6e
topology: v6e:2x2x1
jax: 0.10.0
libtpu: 0.0.40
codegen_flags: <defaults>
</compile_context>

<pallas_src>
import jax
import jax.numpy as jnp
from jax import lax
from jax.experimental import pallas as pl
from jax.experimental.pallas import tpu as pltpu


def _round_up(n, m):
    return ((n + m - 1) // m) * m


def mlp_kernel(x_ref, w1_ref, w2_ref, w3_ref, o_ref):
    """One grid step: TB rows of x -> TB sigmoid outputs.

    x_ref : (TB, D)     compute dtype (bf16 by default)
    w1_ref: (D, D)      compute dtype, PyTorch (out, in) layout
    w2_ref: (D//2, D)   compute dtype, PyTorch (out, in) layout
    w3_ref: (1, D//2)   f32 (VPU path)
    o_ref : (1, TB)     f32, lane-dense output row
    """
    x = x_ref[...]

    # Layer 1: x @ W1^T on the MXU; contract the shared "in" dim of both
    # operands so the native (out, in) weight layout is used directly.
    h1 = lax.dot_general(
        x, w1_ref[...],
        dimension_numbers=(((1,), (1,)), ((), ())),
        preferred_element_type=jnp.float32)
    h1 = jnp.maximum(h1, 0.0)                                # ReLU in f32 (VPU)

    # Layer 2: relu(h1) @ W2^T on the MXU.
    h2 = lax.dot_general(
        h1.astype(x.dtype), w2_ref[...],
        dimension_numbers=(((1,), (1,)), ((), ())),
        preferred_element_type=jnp.float32)
    h2 = jnp.maximum(h2, 0.0)                                # ReLU in f32 (VPU)

    # Layer 3: width-1 projection. A 1-column MXU matmul wastes a full
    # vmatmul push/drain, so do it as VPU multiply + XLU lane-reduce.
    y = jnp.sum(h2 * w3_ref[...], axis=-1)                   # (TB,), f32
    o_ref[0, :] = jax.nn.sigmoid(y).astype(o_ref.dtype)      # lane-dense store


def prepare_mlp_params(w1, w2, w3, compute_dtype=jnp.bfloat16):
    """Cast the MXU weights once (at init time, NOT per forward call).
    Weights stay in PyTorch (out_features, in_features) layout -- no transpose.
    w3 stays f32 because the final projection runs on the VPU/XLU."""
    return (w1.astype(compute_dtype),
            w2.astype(compute_dtype),
            w3.astype(jnp.float32).reshape(1, -1))


def _choose_batch_tile(B, D, itemsize, weight_bytes):
    """Largest batch tile that keeps (resident weights x2 for pipelining)
    + double-buffered x / out tiles inside a conservative VMEM budget
    (v7x has only 64 MiB physical VMEM per TensorCore)."""
    budget = 56 << 20
    if B <= 512:
        return _round_up(max(B, 1), 8)
    for cand in (512, 256, 128, 64, 32, 16, 8):
        tile_bytes = 2 * (cand * D * itemsize + cand * 4)
        if 2 * weight_bytes + tile_bytes <= budget:
            return cand
    return 8


def mlp_forward(x, params):
    """x: (B, D) float32. params: output of prepare_mlp_params.
    Returns squeeze(sigmoid(mlp(x))) like the torch module."""
    w1, w2, w3 = params
    B, D = x.shape
    Dh = D // 2
    assert w1.shape == (D, D) and w2.shape == (Dh, D) and w3.shape == (1, Dh)

    cdt = w1.dtype
    itemsize = jnp.dtype(cdt).itemsize
    x = x.astype(cdt)                                        # bf16 -> halves x DMA bytes

    weight_bytes = w1.size * itemsize + w2.size * itemsize + w3.size * 4
    TB = _choose_batch_tile(B, D, itemsize, weight_bytes)
    B_pad = _round_up(B, TB)
    if B_pad != B:
        x = jnp.pad(x, ((0, B_pad - B), (0, 0)))
    grid = (B_pad // TB,)

    # VMEM budget: weights resident (counted x2 for pipelining buffers) plus
    # double-buffered x / out tiles. Only raise the scoped limit if needed.
    vmem_needed = 2 * weight_bytes + 2 * (TB * D * itemsize + TB * 4)
    vmem_limit = int(vmem_needed * 1.25) if vmem_needed > (30 << 20) else None
    # TODO(synk): for very large D on v7x (64 MiB VMEM) tile the contraction
    # dim over a third grid axis with a VMEM accumulator instead of keeping
    # the full weights resident.

    out = pl.pallas_call(
        mlp_kernel,
        out_shape=jax.ShapeDtypeStruct((1, B_pad), jnp.float32),
        grid_spec=pltpu.PrefetchScalarGridSpec(
            num_scalar_prefetch=0,
            grid=grid,
            in_specs=[
                pl.BlockSpec((TB, D), lambda i: (i, 0)),     # x: streamed
                pl.BlockSpec((D, D), lambda i: (0, 0)),      # W1: VMEM-resident
                pl.BlockSpec((Dh, D), lambda i: (0, 0)),     # W2: VMEM-resident
                pl.BlockSpec((1, Dh), lambda i: (0, 0)),     # w3 row: resident
            ],
            out_specs=pl.BlockSpec((1, TB), lambda i: (0, i)),
        ),
        compiler_params=pltpu.CompilerParams(
            dimension_semantics=("parallel",),
            vmem_limit_bytes=vmem_limit),
    )(x, w1, w2, w3)

    # torch.squeeze removes all size-1 dims: (B, 1) -> (B,)  (or () if B == 1)
    return jnp.squeeze(out.reshape(B_pad)[:B])


if __name__ == "__main__":
    key = jax.random.PRNGKey(0)
    B, D = 8, 32                                             # batch=8, input_size=32
    Dh = D // 2

    kx, k1, k2, k3 = jax.random.split(key, 4)
    x = jax.random.normal(kx, (B, D), dtype=jnp.float32)

    # PyTorch nn.Linear(bias=False) weights in (out_features, in_features).
    b1 = 1.0 / jnp.sqrt(D)
    b3 = 1.0 / jnp.sqrt(Dh)
    w1 = jax.random.uniform(k1, (D, D), jnp.float32, -b1, b1)
    w2 = jax.random.uniform(k2, (Dh, D), jnp.float32, -b1, b1)
    w3 = jax.random.uniform(k3, (1, Dh), jnp.float32, -b3, b3)

    params = prepare_mlp_params(w1, w2, w3)                  # one-time cast
    fwd = jax.jit(mlp_forward)
    y = fwd(x, params)
    jax.block_until_ready(y)

    # Reference with the same mixed precision as the kernel (bf16 MXU
    # operands, f32 accumulation / elementwise).
    cdt = params[0].dtype
    xc = x.astype(cdt)
    h1 = jnp.maximum(
        lax.dot_general(xc, params[0], (((1,), (1,)), ((), ())),
                        preferred_element_type=jnp.float32), 0.0)
    h2 = jnp.maximum(
        lax.dot_general(h1.astype(cdt), params[1], (((1,), (1,)), ((), ())),
                        preferred_element_type=jnp.float32), 0.0)
    y_ref = jnp.squeeze(jax.nn.sigmoid(jnp.sum(h2 * params[2], axis=-1)))

    # Pure-f32 reference of the original torch module (semantics check).
    h1f = jnp.maximum(x @ w1.T, 0.0)
    h2f = jnp.maximum(h1f @ w2.T, 0.0)
    y_f32 = jnp.squeeze(jax.nn.sigmoid(h2f @ w3.T))

    assert y.shape == (B,)
    assert jnp.allclose(y, y_ref, atol=2e-4, rtol=1e-4)
    assert jnp.allclose(y, y_f32, atol=2e-2)

    print("KERNEL_OK")
</pallas_src>

<mosaic_0001>
module attributes {stable_mosaic.version = 11 : i64} {
  func.func @mlp_kernel(%arg0: i32, %arg1: memref<8x32xbf16, #tpu.memory_space<vmem>>, %arg2: memref<32x32xbf16, #tpu.memory_space<vmem>>, %arg3: memref<16x32xbf16, #tpu.memory_space<vmem>>, %arg4: memref<1x16xf32, #tpu.memory_space<vmem>>, %arg5: memref<1x8xf32, #tpu.memory_space<vmem>>) attributes {dimension_semantics = [#tpu.dimension_semantics<parallel>], iteration_bounds = array<i64: 1>, scalar_prefetch = 0 : i64, scratch_operands = 0 : i64, tpu.core_type = #tpu.core_type<tc>, window_params = [{transform_indices = @transform_0, window_bounds = array<i64: 8, 32>}, {pipeline_mode = #tpu.pipeline_mode<synchronous>, transform_indices = @transform_1, window_bounds = array<i64: 32, 32>}, {pipeline_mode = #tpu.pipeline_mode<synchronous>, transform_indices = @transform_2, window_bounds = array<i64: 16, 32>}, {pipeline_mode = #tpu.pipeline_mode<synchronous>, transform_indices = @transform_3, window_bounds = array<i64: 1, 16>}, {transform_indices = @transform_4, window_bounds = array<i64: 1, 8>}]} {
    %c0 = arith.constant 0 : index
    %c0_0 = arith.constant 0 : index
    %0 = vector.load %arg1[%c0, %c0_0] : memref<8x32xbf16, #tpu.memory_space<vmem>>, vector<8x32xbf16>
    %c0_1 = arith.constant 0 : index
    %c0_2 = arith.constant 0 : index
    %1 = vector.load %arg2[%c0_1, %c0_2] : memref<32x32xbf16, #tpu.memory_space<vmem>>, vector<32x32xbf16>
    %cst = arith.constant dense<0.000000e+00> : vector<8x32xf32>
    %2 = tpu.matmul %0, %1, %cst {dimension_numbers = #tpu.dot_dimension_numbers<[1], [1], [0], [0], [0, 0, 1, 0], [], []>} : vector<8x32xbf16>, vector<32x32xbf16>, vector<8x32xf32> -> vector<8x32xf32>
    %cst_3 = arith.constant 0.000000e+00 : f32
    %3 = vector.broadcast %cst_3 : f32 to vector<8x32xf32>
    %4 = arith.maximumf %2, %3 : vector<8x32xf32>
    %5 = arith.truncf %4 : vector<8x32xf32> to vector<8x32xbf16>
    %c0_4 = arith.constant 0 : index
    %c0_5 = arith.constant 0 : index
    %6 = vector.load %arg3[%c0_4, %c0_5] : memref<16x32xbf16, #tpu.memory_space<vmem>>, vector<16x32xbf16>
    %cst_6 = arith.constant dense<0.000000e+00> : vector<8x16xf32>
    %7 = tpu.matmul %5, %6, %cst_6 {dimension_numbers = #tpu.dot_dimension_numbers<[1], [1], [0], [0], [0, 0, 1, 0], [], []>} : vector<8x32xbf16>, vector<16x32xbf16>, vector<8x16xf32> -> vector<8x16xf32>
    %cst_7 = arith.constant 0.000000e+00 : f32
    %8 = vector.broadcast %cst_7 : f32 to vector<8x16xf32>
    %9 = arith.maximumf %7, %8 : vector<8x16xf32>
    %c0_8 = arith.constant 0 : index
    %c0_9 = arith.constant 0 : index
    %10 = vector.load %arg4[%c0_8, %c0_9] : memref<1x16xf32, #tpu.memory_space<vmem>>, vector<1x16xf32>
    %11 = vector.broadcast %10 : vector<1x16xf32> to vector<8x16xf32>
    %12 = arith.mulf %9, %11 : vector<8x16xf32>
    %cst_10 = arith.constant dense<0.000000e+00> : vector<8xf32>
    %13 = vector.multi_reduction <add>, %12, %cst_10 [1] : vector<8x16xf32> to vector<8xf32>
    %14 = arith.negf %13 : vector<8xf32>
    %15 = math.exp %14 : vector<8xf32>
    %cst_11 = arith.constant 1.000000e+00 : f32
    %16 = vector.broadcast %cst_11 : f32 to vector<8xf32>
    %17 = arith.addf %16, %15 : vector<8xf32>
    %18 = arith.divf %16, %17 : vector<8xf32>
    %c0_12 = arith.constant 0 : index
    %c0_13 = arith.constant 0 : index
    %19 = vector.load %arg5[%c0_12, %c0_13] : memref<1x8xf32, #tpu.memory_space<vmem>>, vector<1x8xf32>
    %20 = vector.shape_cast %19 : vector<1x8xf32> to vector<8xf32>
    %21 = vector.shape_cast %18 : vector<8xf32> to vector<1x8xf32>
    tpu.vector_store %arg5[%c0_12, %c0_13], %21 {strides = array<i32>} : memref<1x8xf32, #tpu.memory_space<vmem>>, vector<1x8xf32>,
    return
  }
  func.func @transform_0(%arg0: i32) -> (i32, i32) {
    %c0_i32 = arith.constant 0 : i32
    %c0_i32_0 = arith.constant 0 : i32
    return %arg0, %c0_i32 : i32, i32
  }
  func.func @transform_1(%arg0: i32) -> (i32, i32) {
    %c0_i32 = arith.constant 0 : i32
    %c0_i32_0 = arith.constant 0 : i32
    %c0_i32_1 = arith.constant 0 : i32
    return %c0_i32, %c0_i32_0 : i32, i32
  }
  func.func @transform_2(%arg0: i32) -> (i32, i32) {
    %c0_i32 = arith.constant 0 : i32
    %c0_i32_0 = arith.constant 0 : i32
    %c0_i32_1 = arith.constant 0 : i32
    return %c0_i32, %c0_i32_0 : i32, i32
  }
  func.func @transform_3(%arg0: i32) -> (i32, i32) {
    %c0_i32 = arith.constant 0 : i32
    %c0_i32_0 = arith.constant 0 : i32
    %c0_i32_1 = arith.constant 0 : i32
    return %c0_i32, %c0_i32_0 : i32, i32
  }
  func.func @transform_4(%arg0: i32) -> (i32, i32) {
    %c0_i32 = arith.constant 0 : i32
    %c0_i32_0 = arith.constant 0 : i32
    return %c0_i32, %arg0 : i32, i32
  }
}

</mosaic_0001>

<llo_original>
// kernel: mlp_forward.1
$region0: #{mlp_forward.1}
  #allocation0 [shape = 'u32[]', space=smem, size = 0x4, offset = 0x4, fixed_abs, tag = 'smem constant byte address 0x4 - core index']
  #allocation1 [shape = 'u32[144,128]{1,0:T(1,128)}', space=vmem, size = 0x12000, scoped, tag = 'internal scratch']
  %s0 = inlined_call_operand.vmem [shape: bf16[8,32], index: 0, kind: input, shape index: {}]
  %s1 = inlined_call_operand.hbm [shape: bf16[32,32], index: 1, kind: input, shape index: {}]
  %s2 = inlined_call_operand.vmem [shape: bf16[16,32], index: 2, kind: input, shape index: {}]
  %s3 = inlined_call_operand.vmem [shape: f32[1,16], index: 3, kind: input, shape index: {}]
  %s4 = inlined_call_operand.hbm [shape: f32[1,8], index: 4, kind: output, shape index: {}]
  %s5 = sld [smem:[#allocation0]]
  $region30: #{mlp_forward.1} parent=0
    _
  %s7 = ssub.s32 1, %s5
  %s8 = scalar_select 0, %s7, %s5
  $region1: #{mlp_forward.1} parent=0
    #allocation2 [shape = 'u8[8192]{0}', space=vmem, size = 0x2000, scoped, tag = 'input window, operand 1, single buffered']
    #allocation3 [shape = 's32[1]{0}', space=sflag, size = 0x4, scoped, tag = 'scoped memory for mlp_forward.1']
    #allocation4 [shape = 's32[1]{0}', space=sflag, size = 0x4, scoped, tag = 'scoped memory for mlp_forward.1']
    #allocation5 [shape = 'u8[512]{0}', space=vmem, size = 0x400, scoped, tag = 'output window, operand 0, single buffered']
    %9 = vsyncpa [#allocation3], 0
    %10 = vsyncpa [#allocation4], 0
    // Predicated region
    $region2: #{mlp_forward.1} parent=1 // pred_check
      _
    $region3: #{mlp_forward.1} parent=1 // pred_check_branch
      %12 = sbr.rel (0) target = $region5
    $region4: #{mlp_forward.1} parent=1 // pred_region
      _
    $region5: #{mlp_forward.1} parent=1 // pred_fallthru
      _
    // Predicated region
    $region6: #{mlp_forward.1} parent=1 // pred_check
      _
    $region7: #{mlp_forward.1} parent=1 // pred_check_branch
      %14 = sbr.rel (0) target = $region9
    $region8: #{mlp_forward.1} parent=1 // pred_region
      %s16 = ssub.s32 256, 256
      %17 = vsyncadd [#allocation3], %s16
      %s18 = sshll.u32 [#allocation2], 4
      %s19 = int_to_ptr.vmem [resolvable:$true] %s18
      %24 = dma.hbm_to_vmem [thread:$0]  %s1, 256, %s19, [#allocation3], 64, 64, 4
    $region9: #{mlp_forward.1} parent=1 // pred_fallthru
      _
    // Predicated region
    $region10: #{mlp_forward.1} parent=1 // pred_check
      _
    $region11: #{mlp_forward.1} parent=1 // pred_check_branch
      %26 = sbr.rel (0) target = $region13
    $region12: #{mlp_forward.1} parent=1 // pred_region
      _
    $region13: #{mlp_forward.1} parent=1 // pred_fallthru
      _
    // Predicated region
    $region14: #{mlp_forward.1} parent=1 // pred_check
      _
    $region15: #{mlp_forward.1} parent=1 // pred_check_branch
      %28 = sbr.rel (0) target = $region17
    $region16: #{mlp_forward.1} parent=1 // pred_region
      _
    $region17: #{mlp_forward.1} parent=1 // pred_fallthru
      _
    // Predicated region
    $region18: #{mlp_forward.1} parent=1 // pred_check
      _
    $region19: #{mlp_forward.1} parent=1 // pred_check_branch
      %30 = sbr.rel (0) target = $region21
    $region20: #{mlp_forward.1} parent=1 // pred_region
      %31 = dma.done [#allocation3], 256
    $region21: #{mlp_forward.1} parent=1 // pred_fallthru
      _
    %v33 = vld [vmem:[%s0] sm:$0xf]
    %v34 = vld [vmem:[#allocation2] sm:$0xf]
    %v35 = vld [vmem:[#allocation2 + $0x4] sm:$0xf]
    %v36 = vld [vmem:[#allocation2 + $0x8] sm:$0xf]
    %v37 = vld [vmem:[#allocation2 + $0xc] sm:$0xf]
    %v42 = vunpack.c.l.b16 %v34
    %v43 = vunpack.c.l.b16 %v35
    %v44 = vunpack.c.l.b16 %v36
    %v45 = vunpack.c.l.b16 %v37
    %v46 = vpack.c.b16 %v43, %v42
    %v47 = vpack.c.b16 %v45, %v44
    %vm48 = vcmask 261120
    %v50 = vsel %vm48, %v33, 0
    %v53 = vsel %vm48, %v46, 0
    %v56 = vsel %vm48, %v47, 0
    %58 = vmatprep.subr.bf16.mxu0 0
    %59 = vmatpush1.bf16.xpose.msra.mxu0 0
    %60 = vmatprep.subr.bf16.mxu0 0
    %61 = vmatpush1.bf16.xpose.msra.mxu0 0
    %62 = vmatprep.subr.bf16.mxu0 0
    %63 = vmatpush1.bf16.xpose.msra.mxu0 0
    %64 = vmatprep.subr.bf16.mxu0 0
    %65 = vmatpush1.bf16.xpose.msra.mxu0 0
    %66 = vmatprep.subr.bf16.mxu0 0
    %67 = vmatpush1.bf16.xpose.msra.mxu0 0
    %68 = vmatprep.subr.bf16.mxu0 0
    %69 = vmatpush1.bf16.xpose.msra.mxu0 0
    %70 = vmatprep.subr.bf16.mxu0 0
    %71 = vmatpush1.bf16.xpose.msra.mxu0 %v56
    %72 = vmatprep.subr.bf16.mxu0 0
    %73 = vmatpush1.bf16.xpose.msra.mxu0 %v53
    %74 = vmatprep.subr.bf16.mxu0 0
    %75 = vmatpush2.bf16.xpose.msra.mxu0 0
    %76 = vmatprep.subr.bf16.mxu0 0
    %77 = vmatpush2.bf16.xpose.msra.mxu0 0
    %78 = vmatprep.subr.bf16.mxu0 0
    %79 = vmatpush2.bf16.xpose.msra.mxu0 0
    %80 = vmatprep.subr.bf16.mxu0 0
    %81 = vmatpush2.bf16.xpose.msra.mxu0 0
    %82 = vmatprep.subr.bf16.mxu0 0
    %83 = vmatpush2.bf16.xpose.msra.mxu0 0
    %84 = vmatprep.subr.bf16.mxu0 0
    %85 = vmatpush2.bf16.xpose.msra.mxu0 0
    %86 = vmatprep.subr.bf16.mxu0 0
    %87 = vmatpush2.bf16.xpose.msra.mxu0 0
    %88 = vmatprep.subr.bf16.mxu0 0
    %89 = vmatpush2.bf16.xpose.msra.mxu0 0
    %90 = vmatprep.mubr.bf16.mxu0 0
    %91 = vmatmul.mubr.bf16.gmra.mxu0 %v50
    %v92 = vpop.f32.mrf.mxu0
    %v93 = vadd.f32 0.0, %v92
    %v94 = vpop.f32.mrf.mxu0
    %v95 = vpop.f32.mrf.mxu0
    %v96 = vpop.f32.mrf.mxu0
    %97 = vdwg.mxu0
    %v98 = vmax.f32 %v93, 0.0
    %v99 = vpack.c.bf16 %v98, %v98
    %v100 = vld [vmem:[%s2] sm:$0xf]
    %v101 = vld [vmem:[%s2 + $0x4] sm:$0xf]
    %v104 = vunpack.c.l.b16 %v100
    %v105 = vunpack.c.l.b16 %v101
    %v106 = vpack.c.b16 %v105, %v104
    %v108 = vsel %vm48, %v99, 0
    %v111 = vsel %vm48, %v106, 0
    %113 = vmatprep.subr.bf16.mxu0 0
    %114 = vmatpush1.bf16.xpose.msra.mxu0 0
    %115 = vmatprep.subr.bf16.mxu0 0
    %116 = vmatpush1.bf16.xpose.msra.mxu0 0
    %117 = vmatprep.subr.bf16.mxu0 0
    %118 = vmatpush1.bf16.xpose.msra.mxu0 0
    %119 = vmatprep.subr.bf16.mxu0 0
    %120 = vmatpush1.bf16.xpose.msra.mxu0 0
    %121 = vmatprep.subr.bf16.mxu0 0
    %122 = vmatpush1.bf16.xpose.msra.mxu0 0
    %123 = vmatprep.subr.bf16.mxu0 0
    %124 = vmatpush1.bf16.xpose.msra.mxu0 0
    %125 = vmatprep.subr.bf16.mxu0 0
    %126 = vmatpush1.bf16.xpose.msra.mxu0 0
    %127 = vmatprep.subr.bf16.mxu0 0
    %128 = vmatpush1.bf16.xpose.msra.mxu0 %v111
    %129 = vmatprep.subr.bf16.mxu0 0
    %130 = vmatpush2.bf16.xpose.msra.mxu0 0
    %131 = vmatprep.subr.bf16.mxu0 0
    %132 = vmatpush2.bf16.xpose.msra.mxu0 0
    %133 = vmatprep.subr.bf16.mxu0 0
    %134 = vmatpush2.bf16.xpose.msra.mxu0 0
    %135 = vmatprep.subr.bf16.mxu0 0
    %136 = vmatpush2.bf16.xpose.msra.mxu0 0
    %137 = vmatprep.subr.bf16.mxu0 0
    %138 = vmatpush2.bf16.xpose.msra.mxu0 0
    %139 = vmatprep.subr.bf16.mxu0 0
    %140 = vmatpush2.bf16.xpose.msra.mxu0 0
    %141 = vmatprep.subr.bf16.mxu0 0
    %142 = vmatpush2.bf16.xpose.msra.mxu0 0
    %143 = vmatprep.subr.bf16.mxu0 0
    %144 = vmatpush2.bf16.xpose.msra.mxu0 0
    %145 = vmatprep.mubr.bf16.mxu0 0
    %146 = vmatmul.mubr.bf16.gmra.mxu0 %v108
    %v147 = vpop.f32.mrf.mxu0
    %v148 = vadd.f32 0.0, %v147
    %v149 = vpop.f32.mrf.mxu0
    %v150 = vpop.f32.mrf.mxu0
    %v151 = vpop.f32.mrf.mxu0
    %152 = vdwg.mxu0
    %v153 = vmax.f32 %v148, 0.0
    %v154 = vld [vmem:[%s3] sm:$0x1]
    %v156 = vlaneseq
    %v157 = vshrl.u32 %v156, 7
    %v158 = vsub.s32 0, %v157
    %v159 = vrot.slane %v154, %v158
    %v161 = vmul.f32 %v153, %v159
    %vm162 = vcmask 130048
    %v163 = vsel %vm162, %v161, 0.0
    %164 = vadd.xlane.f32.xlu0 %v163
    %v165 = vpop.xlane.xlu0 %164
    %v166 = vxor.u32 %v165, 2147483648
    %v167 = vmul.f32 %v166, 1.442695
    %v168 = vpow.pop %v167
    %v169 = vadd.f32 %v168, 1.0
    %v170 = vrcp.pop %v169
    %v171 = vmul.f32 1.0, %v170
    %v173 = vlaneseq
    %v174 = vand.u32 %v173, 127
    %v175 = vlaneseq
    %v176 = vshrl.u32 %v175, 7
    %v177 = vsub.s32 %v174, %v176
    %v178 = vrot.slane %v171, %v177
    %vm180 = vcmask 57344
    %181 = vst.msk [vmem:[#allocation5] sm:$0x1] %vm180, %v178
    // Predicated region
    $region22: #{mlp_forward.1} parent=1 // pred_check
      _
    $region23: #{mlp_forward.1} parent=1 // pred_check_branch
      %183 = sbr.rel (0) target = $region25
    $region24: #{mlp_forward.1} parent=1 // pred_region
      %s185 = ssub.s32 16, 16
      %186 = vsyncadd [#allocation4], %s185
      %s188 = sshll.u32 [#allocation5], 4
      %s189 = int_to_ptr.vmem [resolvable:$true] %s188
      %191 = dma.vmem_to_hbm [thread:$0]  %s189, 16, %s4, [#allocation4]
    $region25: #{mlp_forward.1} parent=1 // pred_fallthru
      _
    // Predicated region
    $region26: #{mlp_forward.1} parent=1 // pred_check
      _
    $region27: #{mlp_forward.1} parent=1 // pred_check_branch
      %193 = sbr.rel (0) target = $region29
    $region28: #{mlp_forward.1} parent=1 // pred_region
      %194 = dma.done [#allocation4], 16
    $region29: #{mlp_forward.1} parent=1 // pred_fallthru
      _
    %195 = vsyncpa [#allocation3], 1
    %196 = vsyncpa [#allocation4], 1

</llo_original>
